<compile_context>
chip_gen: v5e
topology: v5e:2x2
jax: 0.10.0
libtpu: 0.0.40
codegen_flags: <defaults>
</compile_context>

<pallas_src>
import jax
import jax.numpy as jnp
from jax.experimental import pallas as pl
from jax.experimental.pallas import tpu as pltpu

_HIDDEN = 32                      # real hidden width of linear1 (as in the PyTorch module)
_LANE = 128                       # TPU lane width — pad hidden/class dims up to this
_NEG_BIG = -1e30                  # finite "minus infinity" for padded class logits
_SINGLE_BUFFER_BYTES = 1 << 20    # single-buffer resident operands bigger than this
_MAX_TILE_ROWS = 2048             # per-grid-step overhead is fully amortized by here


def _round_up(n, m):
    return ((n + m - 1) // m) * m


def _vmem_budget_bytes():
    """Per-generation VMEM budget: ~75% of physical, capped at 100 MiB.
    v5e/v6e (128 MiB physical) -> ~96-100 MiB; v7x (64 MiB physical) -> 48 MiB."""
    try:
        cap = int(pltpu.get_tpu_info().vmem_capacity_bytes)
    except Exception:
        cap = 64 * 1024 * 1024    # conservative (v7x-sized) fallback
    return min((cap * 3) // 4, 100 * 1024 * 1024)


def _resident_spec(shape, nbytes):
    """Constant-index BlockSpec: operand stays resident in VMEM for the whole grid.
    Large resident operands are single-buffered (they never re-DMA), reclaiming VMEM
    headroom that directly buys a larger batch tile (matters on v7x's 64 MiB VMEM)."""
    index_map = lambda *_: (0,) * len(shape)
    if nbytes >= _SINGLE_BUFFER_BYTES:
        try:
            return pl.BlockSpec(shape, index_map, pipeline_mode=pl.Buffered(1))
        except TypeError:  # older jax without pipeline_mode: default double-buffering
            pass
    return pl.BlockSpec(shape, index_map)


# ----------------------------------------------------------------------------
# Kernel 1: inference path  ->  softmax(linear2(relu(linear1(x))), dim=1)
# Grid is over batch tiles; weights/biases use a constant index_map so they stay
# resident in VMEM across all grid steps, while x / out are pipelined by BlockSpec.
# ----------------------------------------------------------------------------
def _mlp_softmax_kernel(x_ref, w1_ref, b1_ref, w2_ref, b2_ref, out_ref):
    # Cast x on the VPU inside the kernel: its HBM stream stays in the input dtype.
    x = x_ref[...].astype(w1_ref.dtype)
    h = jnp.dot(x, w1_ref[...], preferred_element_type=jnp.float32)
    h = jnp.maximum(h + b1_ref[...], 0.0)                       # (TB, 128), f32
    logits = jnp.dot(h.astype(w2_ref.dtype), w2_ref[...],
                     preferred_element_type=jnp.float32)
    logits = logits + b2_ref[...]                               # padded cols ~ -1e30
    m = jnp.max(logits, axis=1, keepdims=True)
    e = jnp.exp(logits - m)                                     # padded cols -> 0
    denom = jnp.sum(e, axis=1, keepdims=True)
    # exact divide: kernel is HBM-bound, so this is free and avoids the ~1e-3 approx error
    out_ref[...] = (e / denom).astype(out_ref.dtype)            # lane-dense (TB, 128) store


# ----------------------------------------------------------------------------
# Kernel 2: training path -> per-sample cross-entropy (logsumexp(logits) - logits[y]).
# Labels arrive as an int32 (TB, 1) block; the one-hot select is built in-kernel
# from an iota compare.  Each grid step writes its own (TB, 1) output block, so the
# grid is fully "parallel" (megacore-shardable); the mean happens in XLA.
# ----------------------------------------------------------------------------
def _mlp_ce_loss_kernel(x_ref, w1_ref, b1_ref, w2_ref, b2_ref, y_ref, loss_ref):
    x = x_ref[...].astype(w1_ref.dtype)
    h = jnp.dot(x, w1_ref[...], preferred_element_type=jnp.float32)
    h = jnp.maximum(h + b1_ref[...], 0.0)
    logits = jnp.dot(h.astype(w2_ref.dtype), w2_ref[...],
                     preferred_element_type=jnp.float32) + b2_ref[...]

    m = jnp.max(logits, axis=1, keepdims=True)
    lse = jnp.log(jnp.sum(jnp.exp(logits - m), axis=1, keepdims=True)) + m   # (TB, 1)
    y = y_ref[...]                                                           # (TB, 1) int32
    cls = jax.lax.broadcasted_iota(jnp.int32, logits.shape, 1)               # (TB, C)
    picked = jnp.sum(jnp.where(cls == y, logits, 0.0), axis=1, keepdims=True)
    loss_ref[...] = lse - picked                                             # (TB, 1) f32


class PallasTorchModel:
    """JAX/Pallas re-implementation of TorchModel's forward pass.

    forward(x)    -> softmax(linear2(relu(linear1(x))), dim=1)   (dtype = compute_dtype)
    forward(x, y) -> mean cross-entropy loss (nn.CrossEntropyLoss default reduction)

    compute_dtype=bfloat16 (default) runs both matmuls on the bf16-native MXU with f32
    accumulation; biases, softmax and the CE math stay f32.
    """

    def __init__(self, input_size, output_size, key, compute_dtype=jnp.bfloat16):
        k1, k2, k3, k4 = jax.random.split(key, 4)
        self.input_size = int(input_size)
        self.output_size = int(output_size)
        self.compute_dtype = jnp.dtype(compute_dtype)
        self.h_pad = _LANE
        self.n_pad = _round_up(max(output_size, _LANE), _LANE)
        # Pad K (input_size) to a multiple of 128 only when it is already >= 128:
        # keeps the streamed x block lane-dense without inflating small inputs 8x.
        self.k_pad = (self.input_size if self.input_size < _LANE
                      else _round_up(self.input_size, _LANE))

        # Deterministic PyTorch-like uniform init at the *real* shapes (kept in f32 for
        # reference / testing), then padded + pre-cast once here (not per __call__).
        bound1 = 1.0 / (input_size ** 0.5)
        bound2 = 1.0 / (_HIDDEN ** 0.5)
        w1 = jax.random.uniform(k1, (input_size, _HIDDEN), jnp.float32, -bound1, bound1)
        b1 = jax.random.uniform(k2, (1, _HIDDEN), jnp.float32, -bound1, bound1)
        w2 = jax.random.uniform(k3, (_HIDDEN, output_size), jnp.float32, -bound2, bound2)
        b2 = jax.random.uniform(k4, (1, output_size), jnp.float32, -bound2, bound2)
        self._raw = (w1, b1, w2, b2)

        cd = self.compute_dtype
        # Zero weight/bias padding on the hidden dim keeps relu(0)=0 exact; -1e30 bias on
        # padded classes makes softmax emit 0 there and leaves logsumexp untouched.
        self.w1 = (jnp.zeros((self.k_pad, self.h_pad), jnp.float32)
                   .at[:input_size, :_HIDDEN].set(w1).astype(cd))
        self.b1 = jnp.zeros((1, self.h_pad), jnp.float32).at[:, :_HIDDEN].set(b1)
        self.w2 = (jnp.zeros((self.h_pad, self.n_pad), jnp.float32)
                   .at[:_HIDDEN, :output_size].set(w2).astype(cd))
        self.b2 = jnp.full((1, self.n_pad), _NEG_BIG, jnp.float32).at[:, :output_size].set(b2)

    def ref_params(self):
        """Unpadded f32 parameters (for pure-JAX reference checks)."""
        return self._raw

    def __call__(self, x, y=None):
        B = x.shape[0]
        cd = self.compute_dtype
        out_itemsize = cd.itemsize
        x_itemsize = jnp.dtype(x.dtype).itemsize

        # --- batch tile: scale to the per-generation VMEM budget ---------------------
        row_align = 8 * max(1, 4 // out_itemsize)          # sublane packing: f32->8, bf16->16
        budget = _vmem_budget_bytes()
        w_nbytes = [int(a.size) * a.dtype.itemsize
                    for a in (self.w1, self.b1, self.w2, self.b2)]
        resident = sum(n if n >= _SINGLE_BUFFER_BYTES else 2 * n for n in w_nbytes)
        # streamed, double-buffered bytes per batch row: x block + out block (+ y/loss)
        per_row = 2 * self.k_pad * x_itemsize + 2 * self.n_pad * out_itemsize + 16
        tb = max(row_align, ((budget - resident) // per_row) // row_align * row_align)
        tb = min(tb, _MAX_TILE_ROWS, _round_up(B, row_align))
        b_pad = _round_up(B, tb)
        # TODO(synk): add a K grid axis (reduction over input chunks) if W1 alone
        # approaches the VMEM budget for very large input_size.

        if b_pad != B or self.k_pad != self.input_size:
            x = jnp.pad(x, ((0, b_pad - B), (0, self.k_pad - self.input_size)))

        in_specs = [
            pl.BlockSpec((tb, self.k_pad), lambda i: (i, 0)),        # x: streamed, input dtype
            _resident_spec((self.k_pad, self.h_pad), w_nbytes[0]),   # W1: resident
            _resident_spec((1, self.h_pad), w_nbytes[1]),            # b1: resident
            _resident_spec((self.h_pad, self.n_pad), w_nbytes[2]),   # W2: resident
            _resident_spec((1, self.n_pad), w_nbytes[3]),            # b2: resident
        ]
        grid = (b_pad // tb,)
        flops = 2 * b_pad * (self.k_pad * self.h_pad + self.h_pad * self.n_pad)
        in_bytes = b_pad * self.k_pad * x_itemsize + sum(w_nbytes)
        compiler_params = pltpu.CompilerParams(
            dimension_semantics=("parallel",),    # independent batch tiles (megacore on v7x)
            vmem_limit_bytes=int(budget))

        if y is None:
            out = pl.pallas_call(
                _mlp_softmax_kernel,
                grid=grid,
                # store in compute dtype: bf16 halves the dominant padded writeback stream
                out_shape=jax.ShapeDtypeStruct((b_pad, self.n_pad), cd),
                in_specs=in_specs,
                out_specs=pl.BlockSpec((tb, self.n_pad), lambda i: (i, 0)),
                compiler_params=compiler_params,
                cost_estimate=pl.CostEstimate(
                    flops=flops,
                    transcendentals=b_pad * self.n_pad,
                    bytes_accessed=in_bytes + b_pad * self.n_pad * out_itemsize),
            )(x, self.w1, self.b1, self.w2, self.b2)
            # NOTE: the slice re-reads the padded block in XLA; fusion-friendly callers
            # can consume the padded (b_pad, n_pad) block directly.
            return out[:B, :self.output_size]

        # Training path: per-sample CE on a parallel grid; padded rows are sliced off
        # in XLA, so no mask and no batch-size constant baked into the kernel.
        y_pad = jnp.zeros((b_pad, 1), jnp.int32).at[:B, 0].set(y.astype(jnp.int32))
        per_sample = pl.pallas_call(
            _mlp_ce_loss_kernel,
            grid=grid,
            out_shape=jax.ShapeDtypeStruct((b_pad, 1), jnp.float32),
            in_specs=in_specs + [pl.BlockSpec((tb, 1), lambda i: (i, 0))],
            out_specs=pl.BlockSpec((tb, 1), lambda i: (i, 0)),
            compiler_params=compiler_params,
            cost_estimate=pl.CostEstimate(
                flops=flops,
                transcendentals=b_pad * self.n_pad,
                bytes_accessed=in_bytes + b_pad * 8),
        )(x, self.w1, self.b1, self.w2, self.b2, y_pad)
        return jnp.mean(per_sample[:B, 0])


if __name__ == "__main__":
    key = jax.random.PRNGKey(0)
    kx, ky, kp = jax.random.split(key, 3)

    batch, input_size, output_size = 8, 16, 4
    x = jax.random.normal(kx, (batch, input_size), jnp.float32)
    y = jax.random.randint(ky, (batch,), 0, output_size)

    # f32 compute path (tight comparison against the pure-JAX reference).
    model_f32 = PallasTorchModel(input_size, output_size, kp, compute_dtype=jnp.float32)
    probs = jax.block_until_ready(model_f32(x))        # inference path: softmax probs
    loss = jax.block_until_ready(model_f32(x, y))      # training path: scalar CE loss

    # Pure-JAX reference on the unpadded f32 weights.
    w1r, b1r, w2r, b2r = model_f32.ref_params()
    h_ref = jnp.maximum(x @ w1r + b1r, 0.0)
    logits_ref = h_ref @ w2r + b2r
    probs_ref = jax.nn.softmax(logits_ref, axis=1)
    loss_ref = jnp.mean(
        jax.nn.logsumexp(logits_ref, axis=1) - logits_ref[jnp.arange(batch), y])

    assert probs.shape == (batch, output_size)
    assert jnp.allclose(probs, probs_ref, atol=2e-3), "softmax path mismatch"
    assert jnp.allclose(loss, loss_ref, atol=1e-4, rtol=1e-4), "loss path mismatch"

    # Default bf16 compute path (v5e/v6e/v7x MXU-native): same underlying weights,
    # looser tolerance; output probabilities are stored/returned in bf16.
    model_bf16 = PallasTorchModel(input_size, output_size, kp)
    probs_bf = jax.block_until_ready(model_bf16(x))
    loss_bf = jax.block_until_ready(model_bf16(x, y))
    assert probs_bf.dtype == jnp.bfloat16
    assert jnp.allclose(probs_bf.astype(jnp.float32), probs_ref, atol=5e-2), "bf16 softmax mismatch"
    assert jnp.allclose(loss_bf, loss_ref, atol=1e-1, rtol=1e-1), "bf16 loss mismatch"

    print("KERNEL_OK")
</pallas_src>

<mosaic_0001>
module attributes {stable_mosaic.version = 11 : i64} {
  func.func @_mlp_softmax_kernel(%arg0: i32, %arg1: memref<8x16xf32, #tpu.memory_space<vmem>>, %arg2: memref<16x128xf32, #tpu.memory_space<vmem>>, %arg3: memref<1x128xf32, #tpu.memory_space<vmem>>, %arg4: memref<128x128xf32, #tpu.memory_space<vmem>>, %arg5: memref<1x128xf32, #tpu.memory_space<vmem>>, %arg6: memref<8x128xf32, #tpu.memory_space<vmem>>) attributes {dimension_semantics = [#tpu.dimension_semantics<parallel>], iteration_bounds = array<i64: 1>, scalar_prefetch = 0 : i64, scratch_operands = 0 : i64, tpu.core_type = #tpu.core_type<tc>, window_params = [{transform_indices = @transform_0, window_bounds = array<i64: 8, 16>}, {pipeline_mode = #tpu.pipeline_mode<synchronous>, transform_indices = @transform_1, window_bounds = array<i64: 16, 128>}, {pipeline_mode = #tpu.pipeline_mode<synchronous>, transform_indices = @transform_2, window_bounds = array<i64: 1, 128>}, {pipeline_mode = #tpu.pipeline_mode<synchronous>, transform_indices = @transform_3, window_bounds = array<i64: 128, 128>}, {pipeline_mode = #tpu.pipeline_mode<synchronous>, transform_indices = @transform_4, window_bounds = array<i64: 1, 128>}, {transform_indices = @transform_5, window_bounds = array<i64: 8, 128>}]} {
    %c0 = arith.constant 0 : index
    %c0_0 = arith.constant 0 : index
    %0 = vector.load %arg1[%c0, %c0_0] : memref<8x16xf32, #tpu.memory_space<vmem>>, vector<8x16xf32>
    %c0_1 = arith.constant 0 : index
    %c0_2 = arith.constant 0 : index
    %1 = vector.load %arg2[%c0_1, %c0_2] : memref<16x128xf32, #tpu.memory_space<vmem>>, vector<16x128xf32>
    %cst = arith.constant dense<0.000000e+00> : vector<8x128xf32>
    %2 = tpu.matmul %0, %1, %cst {dimension_numbers = #tpu.dot_dimension_numbers<[1], [0], [0], [1], [0, 0, 1, 1], [], []>} : vector<8x16xf32>, vector<16x128xf32>, vector<8x128xf32> -> vector<8x128xf32>
    %c0_3 = arith.constant 0 : index
    %c0_4 = arith.constant 0 : index
    %3 = vector.load %arg3[%c0_3, %c0_4] : memref<1x128xf32, #tpu.memory_space<vmem>>, vector<1x128xf32>
    %4 = vector.broadcast %3 : vector<1x128xf32> to vector<8x128xf32>
    %5 = arith.addf %2, %4 : vector<8x128xf32>
    %cst_5 = arith.constant 0.000000e+00 : f32
    %6 = vector.broadcast %cst_5 : f32 to vector<8x128xf32>
    %7 = arith.maximumf %5, %6 : vector<8x128xf32>
    %c0_6 = arith.constant 0 : index
    %c0_7 = arith.constant 0 : index
    %8 = vector.load %arg4[%c0_6, %c0_7] : memref<128x128xf32, #tpu.memory_space<vmem>>, vector<128x128xf32>
    %cst_8 = arith.constant dense<0.000000e+00> : vector<8x128xf32>
    %9 = tpu.matmul %7, %8, %cst_8 {dimension_numbers = #tpu.dot_dimension_numbers<[1], [0], [0], [1], [0, 0, 1, 1], [], []>} : vector<8x128xf32>, vector<128x128xf32>, vector<8x128xf32> -> vector<8x128xf32>
    %c0_9 = arith.constant 0 : index
    %c0_10 = arith.constant 0 : index
    %10 = vector.load %arg5[%c0_9, %c0_10] : memref<1x128xf32, #tpu.memory_space<vmem>>, vector<1x128xf32>
    %11 = vector.broadcast %10 : vector<1x128xf32> to vector<8x128xf32>
    %12 = arith.addf %9, %11 : vector<8x128xf32>
    %cst_11 = arith.constant dense<0xFF800000> : vector<8xf32>
    %13 = vector.multi_reduction <maximumf>, %12, %cst_11 [1] : vector<8x128xf32> to vector<8xf32>
    %14 = vector.shape_cast %13 : vector<8xf32> to vector<8x1xf32>
    %15 = vector.broadcast %14 : vector<8x1xf32> to vector<8x128xf32>
    %16 = arith.subf %12, %15 : vector<8x128xf32>
    %17 = math.exp %16 : vector<8x128xf32>
    %cst_12 = arith.constant dense<0.000000e+00> : vector<8xf32>
    %18 = vector.multi_reduction <add>, %17, %cst_12 [1] : vector<8x128xf32> to vector<8xf32>
    %19 = vector.shape_cast %18 : vector<8xf32> to vector<8x1xf32>
    %20 = vector.broadcast %19 : vector<8x1xf32> to vector<8x128xf32>
    %21 = arith.divf %17, %20 : vector<8x128xf32>
    %c0_13 = arith.constant 0 : index
    %c0_14 = arith.constant 0 : index
    %22 = vector.load %arg6[%c0_13, %c0_14] : memref<8x128xf32, #tpu.memory_space<vmem>>, vector<8x128xf32>
    tpu.vector_store %arg6[%c0_13, %c0_14], %21 {strides = array<i32>} : memref<8x128xf32, #tpu.memory_space<vmem>>, vector<8x128xf32>,
    return
  }
  func.func @transform_0(%arg0: i32) -> (i32, i32) {
    %c0_i32 = arith.constant 0 : i32
    %c0_i32_0 = arith.constant 0 : i32
    return %arg0, %c0_i32 : i32, i32
  }
  func.func @transform_1(%arg0: i32) -> (i32, i32) {
    %c0_i32 = arith.constant 0 : i32
    %c0_i32_0 = arith.constant 0 : i32
    %c0_i32_1 = arith.constant 0 : i32
    return %c0_i32, %c0_i32_0 : i32, i32
  }
  func.func @transform_2(%arg0: i32) -> (i32, i32) {
    %c0_i32 = arith.constant 0 : i32
    %c0_i32_0 = arith.constant 0 : i32
    %c0_i32_1 = arith.constant 0 : i32
    return %c0_i32, %c0_i32_0 : i32, i32
  }
  func.func @transform_3(%arg0: i32) -> (i32, i32) {
    %c0_i32 = arith.constant 0 : i32
    %c0_i32_0 = arith.constant 0 : i32
    %c0_i32_1 = arith.constant 0 : i32
    return %c0_i32, %c0_i32_0 : i32, i32
  }
  func.func @transform_4(%arg0: i32) -> (i32, i32) {
    %c0_i32 = arith.constant 0 : i32
    %c0_i32_0 = arith.constant 0 : i32
    %c0_i32_1 = arith.constant 0 : i32
    return %c0_i32, %c0_i32_0 : i32, i32
  }
  func.func @transform_5(%arg0: i32) -> (i32, i32) {
    %c0_i32 = arith.constant 0 : i32
    %c0_i32_0 = arith.constant 0 : i32
    return %arg0, %c0_i32 : i32, i32
  }
}

</mosaic_0001>

<llo_original>
// kernel: tpu_custom_call.1
$region0: #{tpu_custom_call.1}
  #allocation0 [shape = 'u32[]', space=smem, size = 0x4, offset = 0x4, fixed_abs, tag = 'smem constant byte address 0x4 - core index']
  #allocation1 [shape = 'u32[72,128]{1,0:T(1,128)}', space=vmem, size = 0x9000, scoped, tag = 'internal scratch']
  %s0 = inlined_call_operand.hbm [shape: f32[8,16], index: 0, kind: input, shape index: {}]
  %s1 = inlined_call_operand.hbm [shape: f32[16,128], index: 1, kind: input, shape index: {}]
  %s2 = inlined_call_operand.vmem [shape: f32[1,128], index: 2, kind: input, shape index: {}]
  %s3 = inlined_call_operand.hbm [shape: f32[128,128], index: 3, kind: input, shape index: {}]
  %s4 = inlined_call_operand.vmem [shape: f32[1,128], index: 4, kind: input, shape index: {}]
  %s5 = inlined_call_operand.hbm [shape: f32[8,128], index: 5, kind: output, shape index: {}]
  %s6 = sld [smem:[#allocation0]]
  $region42: #{tpu_custom_call.1} parent=0
    _
  %s8 = ssub.s32 1, %s6
  %s9 = scalar_select 0, %s8, %s6
  $region1: #{tpu_custom_call.1} parent=0
    #allocation2 [shape = 'u8[4096]{0}', space=vmem, size = 0x1000, scoped, tag = 'input window, operand 0, single buffered']
    #allocation3 [shape = 's32[1]{0}', space=sflag, size = 0x4, scoped, tag = 'scoped memory for tpu_custom_call.1']
    #allocation4 [shape = 's32[1]{0}', space=sflag, size = 0x4, scoped, tag = 'scoped memory for tpu_custom_call.1']
    #allocation5 [shape = 'u8[8192]{0}', space=vmem, size = 0x2000, scoped, tag = 'input window, operand 1, single buffered']
    #allocation6 [shape = 's32[1]{0}', space=sflag, size = 0x4, scoped, tag = 'scoped memory for tpu_custom_call.1']
    #allocation7 [shape = 'u8[65536]{0}', space=vmem, size = 0x10000, scoped, tag = 'input window, operand 3, single buffered']
    #allocation8 [shape = 'u8[4096]{0}', space=vmem, size = 0x1000, scoped, tag = 'output window, operand 0, single buffered']
    %10 = vsyncpa [#allocation3], 0
    %11 = vsyncpa [#allocation6], 0
    %12 = vsyncpa [#allocation4], 0
    // Predicated region
    $region2: #{tpu_custom_call.1} parent=1 // pred_check
      _
    $region3: #{tpu_custom_call.1} parent=1 // pred_check_branch
      %14 = sbr.rel (0) target = $region5
    $region4: #{tpu_custom_call.1} parent=1 // pred_region
      %16 = vsyncadd [#allocation3], 0
      %s18 = sshll.u32 %s0, 4
      %s19 = int_to_ptr.hbm [resolvable:$true] %s18
      %s20 = sshll.u32 [#allocation2], 4
      %s21 = int_to_ptr.vmem [resolvable:$true] %s20
      %23 = dma.hbm_to_vmem [thread:$0]  %s19, 128, %s21, [#allocation3]
    $region5: #{tpu_custom_call.1} parent=1 // pred_fallthru
      _
    // Predicated region
    $region6: #{tpu_custom_call.1} parent=1 // pred_check
      _
    $region7: #{tpu_custom_call.1} parent=1 // pred_check_branch
      %25 = sbr.rel (0) target = $region9
    $region8: #{tpu_custom_call.1} parent=1 // pred_region
      %27 = vsyncadd [#allocation6], 0
      %s28 = sshll.u32 %s1, 4
      %s29 = int_to_ptr.hbm [resolvable:$true] %s28
      %s30 = sshll.u32 [#allocation5], 4
      %s31 = int_to_ptr.vmem [resolvable:$true] %s30
      %36 = dma.hbm_to_vmem [thread:$0]  %s29, 256, %s31, [#allocation6], 128, 128, 8
    $region9: #{tpu_custom_call.1} parent=1 // pred_fallthru
      _
    // Predicated region
    $region10: #{tpu_custom_call.1} parent=1 // pred_check
      _
    $region11: #{tpu_custom_call.1} parent=1 // pred_check_branch
      %38 = sbr.rel (0) target = $region13
    $region12: #{tpu_custom_call.1} parent=1 // pred_region
      _
    $region13: #{tpu_custom_call.1} parent=1 // pred_fallthru
      _
    // Predicated region
    $region14: #{tpu_custom_call.1} parent=1 // pred_check
      _
    $region15: #{tpu_custom_call.1} parent=1 // pred_check_branch
      %40 = sbr.rel (0) target = $region17
    $region16: #{tpu_custom_call.1} parent=1 // pred_region
      %42 = vsyncadd [#allocation6], 0
      %s43 = sshll.u32 %s3, 4
      %s44 = int_to_ptr.hbm [resolvable:$true] %s43
      %s45 = sshll.u32 [#allocation7], 4
      %s46 = int_to_ptr.vmem [resolvable:$true] %s45
      %51 = dma.hbm_to_vmem [thread:$0]  %s44, 2048, %s46, [#allocation6], 128, 128, 8
    $region17: #{tpu_custom_call.1} parent=1 // pred_fallthru
      _
    // Predicated region
    $region18: #{tpu_custom_call.1} parent=1 // pred_check
      _
    $region19: #{tpu_custom_call.1} parent=1 // pred_check_branch
      %53 = sbr.rel (0) target = $region21
    $region20: #{tpu_custom_call.1} parent=1 // pred_region
      _
    $region21: #{tpu_custom_call.1} parent=1 // pred_fallthru
      _
    // Predicated region
    $region22: #{tpu_custom_call.1} parent=1 // pred_check
      _
    $region23: #{tpu_custom_call.1} parent=1 // pred_check_branch
      %55 = sbr.rel (0) target = $region25
    $region24: #{tpu_custom_call.1} parent=1 // pred_region
      %57 = dma.done [#allocation3], 128
    $region25: #{tpu_custom_call.1} parent=1 // pred_fallthru
      _
    // Predicated region
    $region26: #{tpu_custom_call.1} parent=1 // pred_check
      _
    $region27: #{tpu_custom_call.1} parent=1 // pred_check_branch
      %59 = sbr.rel (0) target = $region29
    $region28: #{tpu_custom_call.1} parent=1 // pred_region
      %61 = dma.done [#allocation6], 256
    $region29: #{tpu_custom_call.1} parent=1 // pred_fallthru
      _
    // Predicated region
    $region30: #{tpu_custom_call.1} parent=1 // pred_check
      _
    $region31: #{tpu_custom_call.1} parent=1 // pred_check_branch
      %63 = sbr.rel (0) target = $region33
    $region32: #{tpu_custom_call.1} parent=1 // pred_region
      %65 = dma.done [#allocation6], 2048
    $region33: #{tpu_custom_call.1} parent=1 // pred_fallthru
      _
    %v66 = vld [vmem:[#allocation2] sm:$0xff]
    %v67 = vld [vmem:[#allocation5] sm:$0xff]
    %v68 = vld [vmem:[#allocation5 + $0x8] sm:$0xff]
    %v69 = vld [vmem:[%s2] sm:$0x1]
    %v71 = vperm.slane %v69, 0
    %vm73 = vcmask 130048
    %v75 = vsel %vm73, %v66, 0
    %77 = vmatpush.msra.mxu0 0.0
    %78 = vmatpush.msra.mxu0 0.0
    %79 = vmatpush.msra.mxu0 0.0
    %80 = vmatpush.msra.mxu0 0.0
    %81 = vmatpush.msra.mxu0 0.0
    %82 = vmatpush.msra.mxu0 0.0
    %83 = vmatpush.msra.mxu0 0.0
    %84 = vmatpush.msra.mxu0 0.0
    %85 = vmatpush.msra.mxu0 0.0
    %86 = vmatpush.msra.mxu0 0.0
    %87 = vmatpush.msra.mxu0 0.0
    %88 = vmatpush.msra.mxu0 0.0
    %89 = vmatpush.msra.mxu0 0.0
    %90 = vmatpush.msra.mxu0 0.0
    %91 = vmatpush.msra.mxu0 %v68
    %92 = vmatpush.msra.mxu0 %v67
    %93 = vmatmul.f32.gmra.mxu0 %v75
    %v94 = vpop.f32.mrf.mxu0
    %v95 = vadd.f32 %v71, %v94
    %96 = vdwg.mxu0
    %v97 = vmax.f32 %v95, 0.0
    %v98 = vld [vmem:[#allocation7] sm:$0xff]
    %v99 = vld [vmem:[#allocation7 + $0x8] sm:$0xff]
    %v100 = vld [vmem:[#allocation7 + $0x10] sm:$0xff]
    %v101 = vld [vmem:[#allocation7 + $0x18] sm:$0xff]
    %v102 = vld [vmem:[#allocation7 + $0x20] sm:$0xff]
    %v103 = vld [vmem:[#allocation7 + $0x28] sm:$0xff]
    %v104 = vld [vmem:[#allocation7 + $0x30] sm:$0xff]
    %v105 = vld [vmem:[#allocation7 + $0x38] sm:$0xff]
    %v106 = vld [vmem:[#allocation7 + $0x40] sm:$0xff]
    %v107 = vld [vmem:[#allocation7 + $0x48] sm:$0xff]
    %v108 = vld [vmem:[#allocation7 + $0x50] sm:$0xff]
    %v109 = vld [vmem:[#allocation7 + $0x58] sm:$0xff]
    %v110 = vld [vmem:[#allocation7 + $0x60] sm:$0xff]
    %v111 = vld [vmem:[#allocation7 + $0x68] sm:$0xff]
    %v112 = vld [vmem:[#allocation7 + $0x70] sm:$0xff]
    %v113 = vld [vmem:[#allocation7 + $0x78] sm:$0xff]
    %v114 = vld [vmem:[%s4] sm:$0x1]
    %v116 = vperm.slane %v114, 0
    %118 = vmatpush.msra.mxu0 %v113
    %119 = vmatpush.msra.mxu0 %v112
    %120 = vmatpush.msra.mxu0 %v111
    %121 = vmatpush.msra.mxu0 %v110
    %122 = vmatpush.msra.mxu0 %v109
    %123 = vmatpush.msra.mxu0 %v108
    %124 = vmatpush.msra.mxu0 %v107
    %125 = vmatpush.msra.mxu0 %v106
    %126 = vmatpush.msra.mxu0 %v105
    %127 = vmatpush.msra.mxu0 %v104
    %128 = vmatpush.msra.mxu0 %v103
    %129 = vmatpush.msra.mxu0 %v102
    %130 = vmatpush.msra.mxu0 %v101
    %131 = vmatpush.msra.mxu0 %v100
    %132 = vmatpush.msra.mxu0 %v99
    %133 = vmatpush.msra.mxu0 %v98
    %134 = vmatmul.f32.gmra.mxu0 %v97
    %v135 = vpop.f32.mrf.mxu0
    %v136 = vadd.f32 %v116, %v135
    %137 = vdwg.mxu0
    %138 = vmax.xlane.f32.xlu0 %v136
    %v139 = vpop.xlane.xlu0 %138
    %v140 = vsub.f32 %v136, %v139
    %v141 = vmul.f32 %v140, 1.442695
    %v142 = vpow.pop %v141
    %143 = vadd.xlane.f32.xlu0 %v142
    %v144 = vpop.xlane.xlu0 %143
    %v145 = vrcp.pop %v144
    %v146 = vmul.f32 %v144, %v145
    %v147 = vsub.f32 1.0, %v146
    %v148 = vmul.f32 %v145, %v147
    %v149 = vadd.f32 %v145, %v148
    %vm150 = vweird.f32 %v144
    %vm151 = vweird.f32 %v145
    %vm152 = vmor %vm150, %vm151
    %v153 = vsel %vm152, %v145, %v149
    %v154 = vand.u32 2147483647, %v144
    %vm155 = vcmp.eq.f32.partialorder %v154, 8.507059e+37
    %v156 = vand.u32 %v144, 2147483648
    %v157 = vor.u32 1.1754944e-38, %v156
    %v158 = vsel %vm155, %v157, %v153
    %v159 = vmul.f32 %v142, %v158
    %160 = vst [vmem:[#allocation8] sm:$0xff] %v159
    // Predicated region
    $region34: #{tpu_custom_call.1} parent=1 // pred_check
      _
    $region35: #{tpu_custom_call.1} parent=1 // pred_check_branch
      %162 = sbr.rel (0) target = $region37
    $region36: #{tpu_custom_call.1} parent=1 // pred_region
      %164 = vsyncadd [#allocation4], 0
      %s166 = sshll.u32 [#allocation8], 4
      %s167 = int_to_ptr.vmem [resolvable:$true] %s166
      %s168 = sshll.u32 %s5, 4
      %s169 = int_to_ptr.hbm [resolvable:$true] %s168
      %171 = dma.vmem_to_hbm [thread:$0]  %s167, 128, %s169, [#allocation4]
    $region37: #{tpu_custom_call.1} parent=1 // pred_fallthru
      _
    // Predicated region
    $region38: #{tpu_custom_call.1} parent=1 // pred_check
      _
    $region39: #{tpu_custom_call.1} parent=1 // pred_check_branch
      %173 = sbr.rel (0) target = $region41
    $region40: #{tpu_custom_call.1} parent=1 // pred_region
      %175 = dma.done [#allocation4], 128
    $region41: #{tpu_custom_call.1} parent=1 // pred_fallthru
      _
    %176 = vsyncpa [#allocation3], 1
    %177 = vsyncpa [#allocation6], 1
    %178 = vsyncpa [#allocation4], 1

</llo_original>
